<compile_context>
chip_gen: v7x
topology: tpu7x:2x2x1
jax: 0.10.0
libtpu: 0.0.40
codegen_flags: <defaults>
</compile_context>

<pallas_src>
import numpy as np
import jax
import jax.numpy as jnp
from jax.experimental import pallas as pl
from jax.experimental.pallas import tpu as pltpu


# ----------------------------------------------------------------------------
# Host-side reference buffer (matches the PyTorch register_buffer):
#   pe[i, d] = d-th bit (LSB first) of position i, as float32.
# Kept only for parity / reference checking — the kernel does not read it.
# ----------------------------------------------------------------------------
def binary_positional_encoding(max_len: int, dim: int) -> np.ndarray:
    i = np.arange(max_len, dtype=np.int64)[:, None]   # [max_len, 1]
    d = np.arange(dim, dtype=np.int64)[None, :]       # [1, dim]
    return ((i >> d) & 1).astype(np.float32)          # [max_len, dim]


# ----------------------------------------------------------------------------
# Kernel: pure VPU bit extraction, lane-folded output.
#   pos_ref: [TR, k]   int32   (k positions per output row)
#   o_ref  : [TR, k*D] float32 (out[r, j*D + d] = bit d of pos_ref[r, j])
# ----------------------------------------------------------------------------
def _binary_pe_bits_kernel(pos_ref, o_ref):
    tr, c = o_ref.shape
    k = pos_ref.shape[1]
    d = c // k

    lane = jax.lax.broadcasted_iota(jnp.int32, (tr, c), 1)

    if k == 1:
        bit = lane
        pos_rep = jnp.broadcast_to(pos_ref[...], (tr, c))
    else:
        # k > 1 only when d divides 128, so d is a power of two -> cheap bit ops.
        shift = d.bit_length() - 1
        bit = lane & (d - 1)                 # bit index within each D-wide group
        group = lane >> shift                # which of the k positions this lane uses
        p = pos_ref[...]                     # [TR, k]
        pos_rep = jnp.zeros((tr, c), jnp.int32)
        for j in range(k):                   # static loop, k <= 128 (typically 2-8)
            pj = jnp.broadcast_to(p[:, j:j + 1], (tr, c))   # lane broadcast
            pos_rep = jnp.where(group == j, pj, pos_rep)

    # Positions are int32 (< 2^31), so bits >= 31 are always 0; clamp the shift
    # to stay well-defined while matching the int64 reference table.
    bit = jnp.minimum(bit, 31)
    bits = jax.lax.shift_right_logical(pos_rep, bit) & 1
    o_ref[...] = bits.astype(jnp.float32)


def _choose_row_tile(rows: int) -> int:
    # Largest tile from the sweep list that divides `rows` (accepts rows == t).
    for t in (1024, 512, 256, 128, 64, 32, 16, 8):
        if rows >= t and rows % t == 0:
            return t
    return rows


# ----------------------------------------------------------------------------
# Forward wrapper (single pallas_call, no table input)
# ----------------------------------------------------------------------------
def binary_positional_encoding_forward(pos, dim: int):
    """pos: int[B, L] -> float32[B, L, dim]."""
    B, L = pos.shape
    n = B * L
    pos_flat = pos.astype(jnp.int32).reshape(n)

    # Lane-fold k = 128 // dim consecutive positions per output row so stores
    # are unmasked 128-lane wide; fall back to k = 1 otherwise (still correct,
    # just masked stores when dim % 128 != 0).
    if dim <= 128 and 128 % dim == 0 and n % (128 // dim) == 0:
        k = 128 // dim
    else:
        k = 1

    rows, cols = n // k, k * dim
    pos2 = pos_flat.reshape(rows, k)
    tr = _choose_row_tile(rows)

    out2d = pl.pallas_call(
        _binary_pe_bits_kernel,
        out_shape=jax.ShapeDtypeStruct((rows, cols), jnp.float32),
        grid=(rows // tr,),
        in_specs=[pl.BlockSpec((tr, k), lambda r: (r, 0))],
        out_specs=pl.BlockSpec((tr, cols), lambda r: (r, 0)),
        compiler_params=pltpu.CompilerParams(
            dimension_semantics=("parallel",)),
    )(pos2)

    return out2d.reshape(B, L, dim)


class BinaryPositionalEncoding:
    """Thin module-style wrapper mirroring the PyTorch class."""

    def __init__(self, dim: int, max_len: int):
        self.dim = dim
        self.max_len = max_len
        # Buffer kept for parity with the nn.Module; the kernel never reads it.
        self.pos_encoding = jnp.asarray(binary_positional_encoding(max_len, dim))[None]

    def __call__(self, pos):
        return binary_positional_encoding_forward(pos, self.dim)


# ----------------------------------------------------------------------------
# Demo / self-check
# ----------------------------------------------------------------------------
if __name__ == "__main__":
    key = jax.random.PRNGKey(0)

    # --- main check: D = 32 (lane-folded path, k = 4) ---
    B, L = 2, 8
    dim_model, max_len = 32, 16
    pos = jax.random.randint(key, (B, L), 0, max_len, dtype=jnp.int32)

    module = BinaryPositionalEncoding(dim_model, max_len)
    out = jax.block_until_ready(module(pos))

    pe_table = jnp.asarray(binary_positional_encoding(max_len, dim_model))
    ref = jnp.take(pe_table, pos.reshape(-1), axis=0).reshape(B, L, dim_model)

    assert out.shape == (B, L, dim_model)
    assert out.dtype == jnp.float32
    assert bool(jnp.all(jnp.isfinite(out)))
    assert bool(jnp.array_equal(out, ref))

    # --- fallback check: D = 48 (does not divide 128 -> k = 1 path) ---
    B2, L2, dim2, max_len2 = 1, 8, 48, 64
    key2 = jax.random.PRNGKey(0)
    pos2 = jax.random.randint(key2, (B2, L2), 0, max_len2, dtype=jnp.int32)
    out2 = jax.block_until_ready(binary_positional_encoding_forward(pos2, dim2))
    pe2 = jnp.asarray(binary_positional_encoding(max_len2, dim2))
    ref2 = jnp.take(pe2, pos2.reshape(-1), axis=0).reshape(B2, L2, dim2)
    assert bool(jnp.array_equal(out2, ref2))

    print("KERNEL_OK")
</pallas_src>

<mosaic_0001>
module attributes {stable_mosaic.version = 11 : i64} {
  func.func @_binary_pe_bits_kernel(%arg0: i32, %arg1: memref<4x4xi32, #tpu.memory_space<vmem>>, %arg2: memref<4x128xf32, #tpu.memory_space<vmem>>) attributes {dimension_semantics = [#tpu.dimension_semantics<parallel>], iteration_bounds = array<i64: 1>, scalar_prefetch = 0 : i64, scratch_operands = 0 : i64, tpu.core_type = #tpu.core_type<tc>, window_params = [{transform_indices = @transform_0, window_bounds = array<i64: 4, 4>}, {transform_indices = @transform_1, window_bounds = array<i64: 4, 128>}]} {
    %0 = tpu.iota {dimensions = array<i32: 1>} : vector<4x128xi32>
    %c31_i32 = arith.constant 31 : i32
    %1 = vector.broadcast %c31_i32 : i32 to vector<4x128xi32>
    %2 = arith.andi %0, %1 : vector<4x128xi32>
    %c5_i32 = arith.constant 5 : i32
    %3 = vector.broadcast %c5_i32 : i32 to vector<4x128xi32>
    %4 = arith.shrsi %0, %3 : vector<4x128xi32>
    %c0 = arith.constant 0 : index
    %c0_0 = arith.constant 0 : index
    %5 = vector.load %arg1[%c0, %c0_0] : memref<4x4xi32, #tpu.memory_space<vmem>>, vector<4x4xi32>
    %c0_i32 = arith.constant 0 : i32
    %6 = vector.broadcast %c0_i32 : i32 to vector<4x128xi32>
    %7 = vector.extract_strided_slice %5 {offsets = [0, 0], sizes = [4, 1], strides = [1, 1]} : vector<4x4xi32> to vector<4x1xi32>
    %8 = vector.shape_cast %7 : vector<4x1xi32> to vector<4x1xi32>
    %9 = vector.broadcast %8 : vector<4x1xi32> to vector<4x128xi32>
    %c0_i32_1 = arith.constant 0 : i32
    %10 = vector.broadcast %c0_i32_1 : i32 to vector<4x128xi32>
    %11 = arith.cmpi eq, %4, %10 : vector<4x128xi32>
    %12 = arith.select %11, %9, %6 : vector<4x128xi1>, vector<4x128xi32>
    %13 = vector.extract_strided_slice %5 {offsets = [0, 1], sizes = [4, 1], strides = [1, 1]} : vector<4x4xi32> to vector<4x1xi32>
    %14 = vector.shape_cast %13 : vector<4x1xi32> to vector<4x1xi32>
    %15 = vector.broadcast %14 : vector<4x1xi32> to vector<4x128xi32>
    %c1_i32 = arith.constant 1 : i32
    %16 = vector.broadcast %c1_i32 : i32 to vector<4x128xi32>
    %17 = arith.cmpi eq, %4, %16 : vector<4x128xi32>
    %18 = arith.select %17, %15, %12 : vector<4x128xi1>, vector<4x128xi32>
    %19 = vector.extract_strided_slice %5 {offsets = [0, 2], sizes = [4, 1], strides = [1, 1]} : vector<4x4xi32> to vector<4x1xi32>
    %20 = vector.shape_cast %19 : vector<4x1xi32> to vector<4x1xi32>
    %21 = vector.broadcast %20 : vector<4x1xi32> to vector<4x128xi32>
    %c2_i32 = arith.constant 2 : i32
    %22 = vector.broadcast %c2_i32 : i32 to vector<4x128xi32>
    %23 = arith.cmpi eq, %4, %22 : vector<4x128xi32>
    %24 = arith.select %23, %21, %18 : vector<4x128xi1>, vector<4x128xi32>
    %25 = vector.extract_strided_slice %5 {offsets = [0, 3], sizes = [4, 1], strides = [1, 1]} : vector<4x4xi32> to vector<4x1xi32>
    %26 = vector.shape_cast %25 : vector<4x1xi32> to vector<4x1xi32>
    %27 = vector.broadcast %26 : vector<4x1xi32> to vector<4x128xi32>
    %c3_i32 = arith.constant 3 : i32
    %28 = vector.broadcast %c3_i32 : i32 to vector<4x128xi32>
    %29 = arith.cmpi eq, %4, %28 : vector<4x128xi32>
    %30 = arith.select %29, %27, %24 : vector<4x128xi1>, vector<4x128xi32>
    %c31_i32_2 = arith.constant 31 : i32
    %31 = vector.broadcast %c31_i32_2 : i32 to vector<4x128xi32>
    %32 = arith.minsi %2, %31 : vector<4x128xi32>
    %33 = arith.shrui %30, %32 : vector<4x128xi32>
    %c1_i32_3 = arith.constant 1 : i32
    %34 = vector.broadcast %c1_i32_3 : i32 to vector<4x128xi32>
    %35 = arith.andi %33, %34 : vector<4x128xi32>
    %36 = arith.sitofp %35 : vector<4x128xi32> to vector<4x128xf32>
    %c0_4 = arith.constant 0 : index
    %c0_5 = arith.constant 0 : index
    %37 = vector.load %arg2[%c0_4, %c0_5] : memref<4x128xf32, #tpu.memory_space<vmem>>, vector<4x128xf32>
    tpu.vector_store %arg2[%c0_4, %c0_5], %36 {strides = array<i32>} : memref<4x128xf32, #tpu.memory_space<vmem>>, vector<4x128xf32>,
    return
  }
  func.func @transform_0(%arg0: i32) -> (i32, i32) {
    %c0_i32 = arith.constant 0 : i32
    %c0_i32_0 = arith.constant 0 : i32
    return %arg0, %c0_i32 : i32, i32
  }
  func.func @transform_1(%arg0: i32) -> (i32, i32) {
    %c0_i32 = arith.constant 0 : i32
    %c0_i32_0 = arith.constant 0 : i32
    return %arg0, %c0_i32 : i32, i32
  }
}

</mosaic_0001>

<llo_original>
// kernel: tpu_custom_call.1
$region0: #{tpu_custom_call.1}
  #allocation0 [shape = 'u32[]', space=smem, size = 0x4, offset = 0x4, fixed_abs, tag = 'smem constant byte address 0x4 - core index']
  #allocation1 [shape = 'u32[144,128]{1,0:T(1,128)}', space=vmem, size = 0x12000, scoped, tag = 'internal scratch']
  %s0 = inlined_call_operand.hbm [shape: s32[4,4], index: 0, kind: input, shape index: {}]
  %s1 = inlined_call_operand.hbm [shape: f32[4,128], index: 1, kind: output, shape index: {}]
  %s2 = sld [smem:[#allocation0]]
  $region18: #{tpu_custom_call.1} parent=0
    _
  %s4 = ssub.s32 1, %s2
  %s5 = scalar_select 0, %s4, %s2
  $region1: #{tpu_custom_call.1} parent=0
    #allocation2 [shape = 'u8[2048]{0}', space=vmem, size = 0x800, scoped, tag = 'input window, operand 0, single buffered']
    #allocation3 [shape = 's32[1]{0}', space=sflag, size = 0x4, scoped, tag = 'scoped memory for tpu_custom_call.1']
    #allocation4 [shape = 's32[1]{0}', space=sflag, size = 0x4, scoped, tag = 'scoped memory for tpu_custom_call.1']
    #allocation5 [shape = 'u8[2048]{0}', space=vmem, size = 0x800, scoped, tag = 'output window, operand 0, single buffered']
    %6 = vsyncpa [#allocation3], 0
    %7 = vsyncpa [#allocation4], 0
    // Predicated region
    $region2: #{tpu_custom_call.1} parent=1 // pred_check
      _
    $region3: #{tpu_custom_call.1} parent=1 // pred_check_branch
      %9 = sbr.rel (0) target = $region5
    $region4: #{tpu_custom_call.1} parent=1 // pred_region
      %s11 = ssub.s32 64, 64
      %12 = vsyncadd [#allocation3], %s11
      %s14 = sshll.u32 [#allocation2], 4
      %s15 = int_to_ptr.vmem [resolvable:$true] %s14
      %17 = dma.hbm_to_vmem [thread:$0]  %s0, 64, %s15, [#allocation3]
    $region5: #{tpu_custom_call.1} parent=1 // pred_fallthru
      _
    // Predicated region
    $region6: #{tpu_custom_call.1} parent=1 // pred_check
      _
    $region7: #{tpu_custom_call.1} parent=1 // pred_check_branch
      %19 = sbr.rel (0) target = $region9
    $region8: #{tpu_custom_call.1} parent=1 // pred_region
      %20 = dma.done [#allocation3], 64
    $region9: #{tpu_custom_call.1} parent=1 // pred_fallthru
      _
    %v21 = vlaneseq
    %v22 = vand.u32 %v21, 127
    %v23 = vand.u32 %v22, 31
    %v24 = vshra.s32 %v22, 5
    %v25 = vld [vmem:[#allocation2] sm:$0xf]
    %26 = vset.pattern.permute.xlu0 0
    %27 = vperm.xlu0 %26, %v25
    %v28 = vpop.permute.xlu0 %27
    %vm29 = vcmp.eq.s32.totalorder %v24, 0
    %v30 = vsel %vm29, %v28, 0
    %31 = vset.pattern.permute.xlu0 1
    %32 = vperm.xlu0 %31, %v25
    %v33 = vpop.permute.xlu0 %32
    %vm34 = vcmp.eq.s32.totalorder %v24, 1
    %v35 = vsel %vm34, %v33, %v30
    %36 = vset.pattern.permute.xlu0 2
    %37 = vperm.xlu0 %36, %v25
    %v38 = vpop.permute.xlu0 %37
    %vm39 = vcmp.eq.s32.totalorder %v24, 2
    %v40 = vsel %vm39, %v38, %v35
    %41 = vset.pattern.permute.xlu0 3
    %42 = vperm.xlu0 %41, %v25
    %v43 = vpop.permute.xlu0 %42
    %vm44 = vcmp.eq.s32.totalorder %v24, 3
    %v45 = vsel %vm44, %v43, %v40
    %vm46 = vcmp.lt.s32.totalorder %v23, 31
    %v47 = vsel %vm46, %v23, 31
    %v48 = vshrl.u32 %v45, %v47
    %v49 = vand.u32 %v48, 1
    %v50 = vcvt.s32.f32 %v49
    %51 = vst [vmem:[#allocation5] sm:$0xf] %v50
    // Predicated region
    $region10: #{tpu_custom_call.1} parent=1 // pred_check
      _
    $region11: #{tpu_custom_call.1} parent=1 // pred_check_branch
      %53 = sbr.rel (0) target = $region13
    $region12: #{tpu_custom_call.1} parent=1 // pred_region
      %s55 = ssub.s32 64, 64
      %56 = vsyncadd [#allocation4], %s55
      %s58 = sshll.u32 [#allocation5], 4
      %s59 = int_to_ptr.vmem [resolvable:$true] %s58
      %61 = dma.vmem_to_hbm [thread:$0]  %s59, 64, %s1, [#allocation4]
    $region13: #{tpu_custom_call.1} parent=1 // pred_fallthru
      _
    // Predicated region
    $region14: #{tpu_custom_call.1} parent=1 // pred_check
      _
    $region15: #{tpu_custom_call.1} parent=1 // pred_check_branch
      %63 = sbr.rel (0) target = $region17
    $region16: #{tpu_custom_call.1} parent=1 // pred_region
      %64 = dma.done [#allocation4], 64
    $region17: #{tpu_custom_call.1} parent=1 // pred_fallthru
      _
    %65 = vsyncpa [#allocation3], 1
    %66 = vsyncpa [#allocation4], 1

</llo_original>
